<compile_context>
chip_gen: v5e
topology: v5e:2x2
jax: 0.10.0
libtpu: 0.0.40
codegen_flags: <defaults>
</compile_context>

<pallas_src>
import functools
import math

import jax
import jax.numpy as jnp
from jax.experimental import pallas as pl
from jax.experimental.pallas import tpu as pltpu


_GROUP = 8            # rows per dense sublane store group (f32: 8 rows x 128 lanes)
_ONEHOT_MAX_V = 512   # folded-vocab threshold for the MXU one-hot path


def _round_up(x, m):
    return (x + m - 1) // m * m


def _cdiv(a, b):
    return -(-a // b)


# ----------------------------- Pallas kernels ------------------------------ #

def _onehot_kernel(idcol_ref, tab_ref, out_ref):
    """Small-vocab path: out = onehot(ids) @ table  (MXU, lane/sublane dense)."""
    tn = out_ref.shape[0]
    vpad = tab_ref.shape[0]
    iota = jax.lax.broadcasted_iota(jnp.int32, (tn, vpad), 1)
    onehot = (iota == idcol_ref[...]).astype(tab_ref.dtype)       # (tn, Vpad)
    out_ref[...] = jnp.dot(onehot, tab_ref[...],
                           preferred_element_type=jnp.float32).astype(out_ref.dtype)


def _onehot_pos_kernel(idcol_ref, tab_ref, pos_ref, out_ref):
    """Small-vocab tagger path: onehot(ids) @ table + pos_slab (full-tile add)."""
    tn = out_ref.shape[0]
    vpad = tab_ref.shape[0]
    iota = jax.lax.broadcasted_iota(jnp.int32, (tn, vpad), 1)
    onehot = (iota == idcol_ref[...]).astype(tab_ref.dtype)
    emb = jnp.dot(onehot, tab_ref[...], preferred_element_type=jnp.float32)
    out_ref[...] = (emb + pos_ref[...]).astype(out_ref.dtype)


def _gather_kernel(ids_ref, tab_ref, out_ref, rows_ref, *, tn):
    """Large-vocab path: row gather from the VMEM-resident folded table.
    ids_ref: (Npad,) int32 in SMEM (scalar prefetch, pre-clipped in the wrapper).
    Rows are gathered in groups of 8 into a VMEM scratch and written back with
    one dense (8, D) store per group."""
    base = pl.program_id(0) * tn

    def group_body(g, carry):
        gbase = base + g * _GROUP
        for r in range(_GROUP):                       # fully unrolled inner loop
            idx = ids_ref[gbase + r]
            rows_ref[pl.ds(r, 1), :] = tab_ref[pl.ds(idx, 1), :]
        off = pl.multiple_of(g * _GROUP, _GROUP)
        out_ref[pl.ds(off, _GROUP), :] = rows_ref[...]
        return carry

    jax.lax.fori_loop(0, tn // _GROUP, group_body, 0)


def _gather_pos_kernel(ids_ref, tab_ref, pos_ref, out_ref, rows_ref, *, tn):
    """Large-vocab tagger path: row gather + tile-invariant positional slab add
    (pos_ref is (tn, D); tn % S == 0 is enforced in the wrapper so position of
    row r within any tile is r % S)."""
    base = pl.program_id(0) * tn

    def group_body(g, carry):
        gbase = base + g * _GROUP
        for r in range(_GROUP):
            idx = ids_ref[gbase + r]
            rows_ref[pl.ds(r, 1), :] = tab_ref[pl.ds(idx, 1), :]
        off = pl.multiple_of(g * _GROUP, _GROUP)
        out_ref[pl.ds(off, _GROUP), :] = rows_ref[...] + pos_ref[pl.ds(off, _GROUP), :]
        return carry

    jax.lax.fori_loop(0, tn // _GROUP, group_body, 0)


# ------------------------------ wrapper (glue) ------------------------------ #

def _vmem_limit_bytes(resident_tables, tn, d):
    """Computed scoped-VMEM request: resident tables are double-buffered by the
    pipeline (constant block index still allocates 2 buffers), plus the
    double-buffered (tn, D) output tile, the lane-padded id column and ~4 MiB
    slack for Mosaic internal scratch.  Capped at 64 MiB for v7x portability."""
    tab = 2 * sum(int(t.size) * t.dtype.itemsize for t in resident_tables)
    out = 2 * tn * max(d, 128) * 4
    ids = 2 * tn * 128 * 4
    need = tab + out + ids + (4 << 20)
    return int(min(max(need, 8 << 20), 64 << 20))


def _choose_tn(n_tokens, row_multiple, target=256):
    """Tile height: multiple of lcm(8, row_multiple), aimed at `target` rows for
    large N, shrunk for small N so the grid keeps >= 2 steps when possible."""
    base = (row_multiple * 8) // math.gcd(row_multiple, 8)
    nblocks = max(1, _cdiv(n_tokens, base))
    per_tile = max(1, min(max(target // base, 1), _cdiv(nblocks, 2)))
    return base * per_tile


def _fold_table(params, buffers, factorized, pooler):
    """Fold id->factor remaps AND the pooler into a single full-vocab table
    (done once in the wrapper; the kernel is then a pure single-table lookup)."""
    if not factorized:
        return params['emb']
    tok_full = jnp.take(params['token_emb'], buffers['id_to_token'], axis=0)
    num_full = jnp.take(params['number_emb'], buffers['id_to_number'], axis=0)
    if pooler == 'sum':
        return tok_full + num_full
    if pooler == 'max':
        return jnp.maximum(tok_full, num_full)
    if pooler == 'mul':
        return tok_full * num_full
    raise ValueError(f"unknown pooler: '{pooler}'")


def _prep_ids(x, tn, vmax):
    """Flatten, clip (hoisted out of the kernel) and pad ids to a multiple of tn.
    Padding is at the END, so padded rows are sliced off afterwards."""
    B, S = x.shape
    N = B * S
    npad = _round_up(N, tn)
    ids = jnp.clip(x.reshape(-1).astype(jnp.int32), 0, vmax)
    ids = jnp.zeros((npad,), jnp.int32).at[:N].set(ids)
    return ids, N, npad


def _run_onehot(ids, tables, d, tn, kernel):
    """Small-vocab MXU path.  ids: (Npad,) int32 -> fed as an (Npad, 1) VMEM
    column; tables are whole-resident VMEM blocks (constant block index)."""
    npad = ids.shape[0]
    grid = (npad // tn,)
    in_specs = [pl.BlockSpec((tn, 1), lambda i: (i, 0))]
    in_specs += [pl.BlockSpec(t.shape, lambda i: (0, 0)) for t in tables]
    out_specs = pl.BlockSpec((tn, d), lambda i: (i, 0))
    return pl.pallas_call(
        kernel,
        out_shape=jax.ShapeDtypeStruct((npad, d), jnp.float32),
        grid=grid,
        in_specs=in_specs,
        out_specs=out_specs,
        compiler_params=pltpu.CompilerParams(
            dimension_semantics=("parallel",),
            vmem_limit_bytes=_vmem_limit_bytes(tables, tn, d),
        ),
    )(ids.reshape(npad, 1), *tables)


def _run_gather(ids, tables, d, tn, kernel):
    """Large-vocab gather path.  ids: (Npad,) int32 scalar-prefetched into SMEM;
    tables whole-resident in VMEM; (8, D) VMEM scratch for grouped stores."""
    npad = ids.shape[0]
    grid = (npad // tn,)
    in_specs = [pl.BlockSpec(t.shape, lambda i, ids_ref: (0, 0)) for t in tables]
    out_specs = pl.BlockSpec((tn, d), lambda i, ids_ref: (i, 0))
    return pl.pallas_call(
        kernel,
        out_shape=jax.ShapeDtypeStruct((npad, d), jnp.float32),
        grid_spec=pltpu.PrefetchScalarGridSpec(
            num_scalar_prefetch=1,
            grid=grid,
            in_specs=in_specs,
            out_specs=out_specs,
            scratch_shapes=[pltpu.VMEM((_GROUP, d), jnp.float32)],
        ),
        compiler_params=pltpu.CompilerParams(
            dimension_semantics=("parallel",),
            vmem_limit_bytes=_vmem_limit_bytes(tables, tn, d),
        ),
    )(ids, *tables)


def _pad_vocab(table):
    """Pad the folded table's vocab dim to a multiple of 128 (zero rows) so the
    one-hot operand is lane-dense for the MXU."""
    V, D = table.shape
    vpad = _round_up(V, 128)
    if vpad == V:
        return table
    return jnp.zeros((vpad, D), table.dtype).at[:V].set(table)


def token_emb_forward(x, params, buffers, *, factorized, pooler='sum',
                      target_tn=256, onehot_max_v=_ONEHOT_MAX_V):
    """Pallas implementation of TokenEmb.forward.  x: (B, S) int32 -> (B, S, D) f32."""
    B, S = x.shape
    table = _fold_table(params, buffers, factorized, pooler)      # (V, D)
    V, D = table.shape
    tn = _choose_tn(B * S, 1, target_tn)
    ids, N, _ = _prep_ids(x, tn, V - 1)

    if V <= onehot_max_v:
        out = _run_onehot(ids, [_pad_vocab(table)], D, tn, _onehot_kernel)
    else:
        out = _run_gather(ids, [table], D, tn,
                          functools.partial(_gather_kernel, tn=tn))
    return out[:N].reshape(B, S, D)


def tagger_embed_forward(x, params, buffers, *, factorized,
                         target_tn=256, onehot_max_v=_ONEHOT_MAX_V):
    """TransformerTagger embedding stage: TokenEmb(pooler='sum')(x) + posemb(arange(S)),
    fused into one kernel (positional add is a full-tile add of a tile-invariant
    (tn, D) slab; tn is a multiple of S)."""
    B, S = x.shape
    table = _fold_table(params, buffers, factorized, 'sum')
    V, D = table.shape
    tn = _choose_tn(B * S, S, target_tn)          # tn % S == 0
    ids, N, _ = _prep_ids(x, tn, V - 1)
    pos_slab = jnp.tile(params['posemb'][:S], (tn // S, 1))       # (tn, D)

    if V <= onehot_max_v:
        out = _run_onehot(ids, [_pad_vocab(table), pos_slab], D, tn,
                          _onehot_pos_kernel)
    else:
        out = _run_gather(ids, [table, pos_slab], D, tn,
                          functools.partial(_gather_pos_kernel, tn=tn))
    return out[:N].reshape(B, S, D)


# ------------------------- deterministic param setup ------------------------ #

def build_vocab_and_params(dim, maxpos, key):
    """Synthetic vocab + embedding tables mirroring TokenEmb.__init__ /
    TransformerTagger.__init__ (posemb)."""
    keys = ['<pad>', '<unk>'] + [f"w{i}::{j}" for i in range(5) for j in range(4)]
    vocab_D = {k: i for i, k in enumerate(keys)}
    vocabsize = len(vocab_D)

    token_vocab, number_vocab = {}, {}
    id_to_token = [0] * vocabsize
    id_to_number = [0] * vocabsize
    for k, v in vocab_D.items():
        token, number = (k.split('::') if '::' in k else (k, '0'))
        if token not in token_vocab:
            token_vocab[token] = len(token_vocab)
        id_to_token[v] = token_vocab[token]
        if number not in number_vocab:
            number_vocab[number] = len(number_vocab)
        id_to_number[v] = number_vocab[number]

    id_to_token = jnp.asarray(id_to_token, dtype=jnp.int32)
    id_to_number = jnp.asarray(id_to_number, dtype=jnp.int32)
    n_tok = max(token_vocab.values()) + 1
    n_num = max(number_vocab.values()) + 1

    k1, k2, k3, k4 = jax.random.split(key, 4)
    params = dict(
        token_emb=jax.random.normal(k1, (n_tok, dim), dtype=jnp.float32),
        number_emb=jax.random.normal(k2, (n_num, dim), dtype=jnp.float32),
        emb=jax.random.normal(k3, (vocabsize, dim), dtype=jnp.float32),
        posemb=jax.random.normal(k4, (maxpos, dim), dtype=jnp.float32),
    )
    buffers = dict(id_to_token=id_to_token, id_to_number=id_to_number)
    return vocabsize, params, buffers


# ------------------------------ pure-JAX reference --------------------------- #

def ref_token_emb(x, params, buffers, *, factorized, pooler='sum'):
    if factorized:
        tokenemb = params['token_emb'][buffers['id_to_token'][x]]
        numberemb = params['number_emb'][buffers['id_to_number'][x]]
        if pooler == 'sum':
            return tokenemb + numberemb
        if pooler == 'max':
            return jnp.maximum(tokenemb, numberemb)
        if pooler == 'mul':
            return tokenemb * numberemb
        raise ValueError(pooler)
    return params['emb'][x]


def ref_tagger_embed(x, params, buffers, *, factorized):
    e = ref_token_emb(x, params, buffers, factorized=factorized, pooler='sum')
    S = x.shape[1]
    return e + params['posemb'][:S][None]


# ---------------------------------- main ------------------------------------ #

if __name__ == "__main__":
    B, S, MAXPOS = 2, 8, 512
    key = jax.random.PRNGKey(0)
    kparam, kx = jax.random.split(key)

    ok = True
    # D=128: lane-dense output (realistic d_model tile).  D=32: non-128 width
    # sanity check (documented slow path: masked stores, still correct).
    for D in (128, 32):
        vocabsize, params, buffers = build_vocab_and_params(D, MAXPOS, kparam)
        x = jax.random.randint(kx, (B, S), 0, vocabsize, dtype=jnp.int32)

        # onehot_max_v=512 -> MXU one-hot path (demo V=22); 0 -> force gather path.
        for onehot_max_v in (_ONEHOT_MAX_V, 0):
            # factorized TokenEmb, all three poolers (pooler fused in the wrapper)
            for pooler in ('sum', 'max', 'mul'):
                out = jax.block_until_ready(token_emb_forward(
                    x, params, buffers, factorized=True, pooler=pooler,
                    onehot_max_v=onehot_max_v))
                ref = ref_token_emb(x, params, buffers, factorized=True, pooler=pooler)
                ok &= bool(jnp.allclose(out, ref, atol=1e-5, rtol=1e-5))
                ok &= (out.shape == (B, S, D))

            # non-factorized TokenEmb
            out = jax.block_until_ready(token_emb_forward(
                x, params, buffers, factorized=False, onehot_max_v=onehot_max_v))
            ref = ref_token_emb(x, params, buffers, factorized=False)
            ok &= bool(jnp.allclose(out, ref, atol=1e-5, rtol=1e-5))
            ok &= (out.shape == (B, S, D))

            # TransformerTagger embedding stage (TokenEmb 'sum' + positional emb, fused)
            out = jax.block_until_ready(tagger_embed_forward(
                x, params, buffers, factorized=True, onehot_max_v=onehot_max_v))
            ref = ref_tagger_embed(x, params, buffers, factorized=True)
            ok &= bool(jnp.allclose(out, ref, atol=1e-5, rtol=1e-5))
            ok &= (out.shape == (B, S, D))

    if ok:
        print("KERNEL_OK")
    else:
        print("MISMATCH")
</pallas_src>

<mosaic_0001>
module attributes {stable_mosaic.version = 11 : i64} {
  func.func @_onehot_kernel(%arg0: i32, %arg1: memref<8x1xi32, #tpu.memory_space<vmem>>, %arg2: memref<128x128xf32, #tpu.memory_space<vmem>>, %arg3: memref<8x128xf32, #tpu.memory_space<vmem>>) attributes {dimension_semantics = [#tpu.dimension_semantics<parallel>], iteration_bounds = array<i64: 2>, scalar_prefetch = 0 : i64, scratch_operands = 0 : i64, tpu.core_type = #tpu.core_type<tc>, window_params = [{transform_indices = @transform_0, window_bounds = array<i64: 8, 1>}, {pipeline_mode = #tpu.pipeline_mode<synchronous>, transform_indices = @transform_1, window_bounds = array<i64: 128, 128>}, {transform_indices = @transform_2, window_bounds = array<i64: 8, 128>}]} {
    %0 = tpu.iota {dimensions = array<i32: 1>} : vector<8x128xi32>
    %c0 = arith.constant 0 : index
    %c0_0 = arith.constant 0 : index
    %1 = vector.load %arg1[%c0, %c0_0] : memref<8x1xi32, #tpu.memory_space<vmem>>, vector<8x1xi32>
    %2 = vector.broadcast %1 : vector<8x1xi32> to vector<8x128xi32>
    %3 = arith.cmpi eq, %0, %2 : vector<8x128xi32>
    %4 = arith.extui %3 : vector<8x128xi1> to vector<8x128xi32>
    %5 = arith.sitofp %4 : vector<8x128xi32> to vector<8x128xf32>
    %c0_1 = arith.constant 0 : index
    %c0_2 = arith.constant 0 : index
    %6 = vector.load %arg2[%c0_1, %c0_2] : memref<128x128xf32, #tpu.memory_space<vmem>>, vector<128x128xf32>
    %cst = arith.constant dense<0.000000e+00> : vector<8x128xf32>
    %7 = tpu.matmul %5, %6, %cst {dimension_numbers = #tpu.dot_dimension_numbers<[1], [0], [0], [1], [0, 0, 1, 1], [], []>} : vector<8x128xf32>, vector<128x128xf32>, vector<8x128xf32> -> vector<8x128xf32>
    %c0_3 = arith.constant 0 : index
    %c0_4 = arith.constant 0 : index
    %8 = vector.load %arg3[%c0_3, %c0_4] : memref<8x128xf32, #tpu.memory_space<vmem>>, vector<8x128xf32>
    tpu.vector_store %arg3[%c0_3, %c0_4], %7 {strides = array<i32>} : memref<8x128xf32, #tpu.memory_space<vmem>>, vector<8x128xf32>,
    return
  }
  func.func @transform_0(%arg0: i32) -> (i32, i32) {
    %c0_i32 = arith.constant 0 : i32
    %c0_i32_0 = arith.constant 0 : i32
    return %arg0, %c0_i32 : i32, i32
  }
  func.func @transform_1(%arg0: i32) -> (i32, i32) {
    %c0_i32 = arith.constant 0 : i32
    %c0_i32_0 = arith.constant 0 : i32
    %c0_i32_1 = arith.constant 0 : i32
    return %c0_i32, %c0_i32_0 : i32, i32
  }
  func.func @transform_2(%arg0: i32) -> (i32, i32) {
    %c0_i32 = arith.constant 0 : i32
    %c0_i32_0 = arith.constant 0 : i32
    return %arg0, %c0_i32 : i32, i32
  }
}

</mosaic_0001>

<llo_original>
// kernel: tpu_custom_call.1
$region0: #{tpu_custom_call.1}
  #allocation0 [shape = 'u32[]', space=smem, size = 0x4, offset = 0x4, fixed_abs, tag = 'smem constant byte address 0x4 - core index']
  #allocation1 [shape = 'u32[72,128]{1,0:T(1,128)}', space=vmem, size = 0x9000, scoped, tag = 'internal scratch']
  %s0 = inlined_call_operand.vmem [shape: s32[16,1], index: 0, kind: input, shape index: {}]
  %s1 = inlined_call_operand.hbm [shape: f32[128,128], index: 1, kind: input, shape index: {}]
  %s2 = inlined_call_operand.hbm [shape: f32[16,128], index: 2, kind: output, shape index: {}]
  %s3 = sld [smem:[#allocation0]]
  $region45: #{tpu_custom_call.1} parent=0
    _
  %s5 = ssub.s32 1, %s3
  %s6 = scalar_select 0, %s5, %s3
  $region1: #{tpu_custom_call.1} parent=0
    #allocation2 [shape = 'u8[65536]{0}', space=vmem, size = 0x10000, scoped, tag = 'input window, operand 1, single buffered']
    #allocation3 [shape = 's32[2]{0}', space=sflag, size = 0x8, scoped, tag = 'scoped memory for tpu_custom_call.1']
    #allocation4 [shape = 's32[2]{0}', space=sflag, size = 0x8, scoped, tag = 'scoped memory for tpu_custom_call.1']
    #allocation5 [shape = 'u8[8192]{0}', space=vmem, size = 0x2000, scoped, tag = 'output window, operand 0']
    %7 = vsyncpa [#allocation3], 0
    %8 = vsyncpa [#allocation4], 0
    %s9 = scalar_lea.sflag [#allocation4], 1
    %10 = vsyncpa %s9, 0
    loop: start=0, step=1, limit=4
    $region2: #{tpu_custom_call.1} parent=1 // loop_pre_header
      _
    $region3: #{tpu_custom_call.1} parent=1 // loop_header
      %s12 = sphi 0, %s16
      %p13 = scmp.ge.s32.totalorder %s12, 4
      %s22 = sphi 0, %s24
      %s25 = sphi 0, %s22
      %s26 = sphi 0, %s25
      %s42 = sphi 0, %s26
      %s46 = sphi 0, %s46
      %s48 = sphi 0, %s46
      %s49 = sphi 0, %s48
      %s63 = sphi 0, %s49
      %s69 = sphi 0, %s71
      %s72 = sphi 0, %s69
      %s73 = sphi 0, %s72
      %s89 = sphi 0, %s73
    $region4: #{tpu_custom_call.1} parent=1 // loop_header_branch
      %15 = sbr.rel (%p13) target = $region8
    $region5: #{tpu_custom_call.1} parent=1 // loop_body
      %s17 = ssub.s32 %s12, 1
      %s18 = ssub.s32 %s12, 2
      %s19 = sadd.s32 %s12, 1
      %s20 = ssub.s32 %s12, %s19
      %p21 = scmp.eq.s32.totalorder %s20, 0
      %s23 = sadd.s32 %s22, 1
      %s24 = scalar_select %p21, %s22, %s23
      %p27 = pneg %p21
      %p28 = scmp.eq.s32.totalorder %s12, 1
      %p29 = por %p27, %p28
      %p30 = scmp.ne.s32.totalorder %s22, %s25
      %p31 = scmp.eq.s32.totalorder %s12, 0
      %p32 = por %p30, %p31
      %p33 = scmp.ne.s32.totalorder %s22, %s25
      %p34 = scmp.eq.s32.totalorder %s17, 1
      %p35 = por %p33, %p34
      %p36 = scmp.ne.s32.totalorder %s25, %s26
      %p37 = scmp.eq.s32.totalorder %s17, 0
      %p38 = por %p36, %p37
      %p39 = scmp.ne.s32.totalorder %s25, %s26
      %p40 = scmp.eq.s32.totalorder %s18, 1
      %p41 = por %p39, %p40
      %p43 = scmp.ne.s32.totalorder %s26, %s42
      %p44 = scmp.eq.s32.totalorder %s18, 0
      %p45 = por %p43, %p44
      %s47 = sadd.s32 %s46, 1
      %p50 = scmp.eq.s32.totalorder %s12, 1
      %p51 = scmp.ne.s32.totalorder %s46, %s48
      %p52 = scmp.eq.s32.totalorder %s12, 0
      %p53 = por %p51, %p52
      %p54 = scmp.ne.s32.totalorder %s46, %s48
      %p55 = scmp.eq.s32.totalorder %s17, 1
      %p56 = por %p54, %p55
      %p57 = scmp.ne.s32.totalorder %s48, %s49
      %p58 = scmp.eq.s32.totalorder %s17, 0
      %p59 = por %p57, %p58
      %p60 = scmp.ne.s32.totalorder %s48, %s49
      %p61 = scmp.eq.s32.totalorder %s18, 1
      %p62 = por %p60, %p61
      %p64 = scmp.ne.s32.totalorder %s49, %s63
      %p65 = scmp.eq.s32.totalorder %s18, 0
      %p66 = por %p64, %p65
      %s67 = ssub.s32 %s12, %s19
      %p68 = scmp.eq.s32.totalorder %s67, 0
      %s70 = sadd.s32 %s69, 1
      %s71 = scalar_select %p68, %s69, %s70
      %p74 = pneg %p68
      %p75 = scmp.eq.s32.totalorder %s12, 1
      %p76 = por %p74, %p75
      %p77 = scmp.ne.s32.totalorder %s69, %s72
      %p78 = scmp.eq.s32.totalorder %s12, 0
      %p79 = por %p77, %p78
      %p80 = scmp.ne.s32.totalorder %s69, %s72
      %p81 = scmp.eq.s32.totalorder %s17, 1
      %p82 = por %p80, %p81
      %p83 = scmp.ne.s32.totalorder %s72, %s73
      %p84 = scmp.eq.s32.totalorder %s17, 0
      %p85 = por %p83, %p84
      %p86 = scmp.ne.s32.totalorder %s72, %s73
      %p87 = scmp.eq.s32.totalorder %s18, 1
      %p88 = por %p86, %p87
      %p90 = scmp.ne.s32.totalorder %s73, %s89
      %p91 = scmp.eq.s32.totalorder %s18, 0
      %p92 = por %p90, %p91
      %p93 = scmp.le.s32.totalorder 1, %s12
      %p94 = scmp.lt.s32.totalorder %s12, 3
      %p95 = pnand %p93, %p94
      %p96 = pneg %p95
      // Predicated region
      $region9: #{tpu_custom_call.1} parent=5 // pred_check
        _
      $region10: #{tpu_custom_call.1} parent=5 // pred_check_branch
        %98 = sbr.rel (%p95) target = $region12
      $region11: #{tpu_custom_call.1} parent=5 // pred_region
        %s99 = ssub.s32 %s12, 1
        // Predicated region
        $region13: #{tpu_custom_call.1} parent=11 // pred_check
          %p100 = pneg %p59
        $region14: #{tpu_custom_call.1} parent=11 // pred_check_branch
          %102 = sbr.rel (%p100) target = $region16
        $region15: #{tpu_custom_call.1} parent=11 // pred_region
          %104 = vsyncadd [#allocation3], 0
          %s105 = sshll.u32 %s1, 4
          %s106 = int_to_ptr.hbm [resolvable:$true] %s105
          %s107 = sshll.u32 [#allocation2], 4
          %s108 = int_to_ptr.vmem [resolvable:$true] %s107
          %113 = dma.hbm_to_vmem [thread:$0]  %s106, 2048, %s108, [#allocation3], 128, 128, 8
        $region16: #{tpu_custom_call.1} parent=11 // pred_fallthru
          _
      $region12: #{tpu_custom_call.1} parent=5 // pred_fallthru
        _
      %p114 = scmp.lt.s32.totalorder %s12, 2
      // Predicated region
      $region17: #{tpu_custom_call.1} parent=5 // pred_check
        %p115 = pneg %p114
      $region18: #{tpu_custom_call.1} parent=5 // pred_check_branch
        %117 = sbr.rel (%p115) target = $region20
      $region19: #{tpu_custom_call.1} parent=5 // pred_region
        // Predicated region
        $region21: #{tpu_custom_call.1} parent=19 // pred_check
          %p118 = pneg %p32
        $region22: #{tpu_custom_call.1} parent=19 // pred_check_branch
          %120 = sbr.rel (%p118) target = $region24
        $region23: #{tpu_custom_call.1} parent=19 // pred_region
          %p121 = scmp.lt.s32.totalorder %s12, 1
          %s122 = scalar_select %p121, %s12, 1
          %s123 = smul.addr %s122, 8
          %s124 = scalar_lea.vmem %s0, %s123
        $region24: #{tpu_custom_call.1} parent=19 // pred_fallthru
          _
      $region20: #{tpu_custom_call.1} parent=5 // pred_fallthru
        _
      %p125 = scmp.le.s32.totalorder 1, %s12
      %p126 = scmp.lt.s32.totalorder %s12, 3
      %p127 = pnand %p125, %p126
      %p128 = pneg %p127
      // Predicated region
      $region25: #{tpu_custom_call.1} parent=5 // pred_check
        _
      $region26: #{tpu_custom_call.1} parent=5 // pred_check_branch
        %130 = sbr.rel (%p127) target = $region28
      $region27: #{tpu_custom_call.1} parent=5 // pred_region
        %s131 = ssub.s32 %s12, 1
        // Predicated region
        $region29: #{tpu_custom_call.1} parent=27 // pred_check
          %p132 = pneg %p59
        $region30: #{tpu_custom_call.1} parent=27 // pred_check_branch
          %134 = sbr.rel (%p132) target = $region32
        $region31: #{tpu_custom_call.1} parent=27 // pred_region
          %136 = dma.done [#allocation3], 2048
        $region32: #{tpu_custom_call.1} parent=27 // pred_fallthru
          _
        %p137 = scmp.lt.s32.totalorder %s17, 1
        %s138 = scalar_select %p137, %s17, 1
        %s139 = smul.addr %s138, 8
        %s140 = scalar_lea.vmem %s0, %s139
        %p141 = pneg %p38
        %p142 = pneg %p35
        %p143 = pneg %p59
        %p144 = pneg %p56
        %p145 = pneg %p85
        %p146 = pneg %p82
        %s147 = sand.u32 %s72, 1
        %s148 = scalar_lea.sflag [#allocation4], %s147
        %s149 = sand.u32 %s72, 1
        %s150 = smul.addr %s149, 8
        %s151 = scalar_lea.vmem [#allocation5], %s150
        %p152 = scmp.lt.s32.totalorder %s17, 1
        %s153 = scalar_select %p152, %s17, 1
        %s154 = smul.addr %s153, 8
        %s155 = scalar_lea.vmem %s0, %s154
        %v156 = vlaneseq
        %v157 = vand.u32 %v156, 127
        %v158 = vld [vmem:[%s155] sm:$0xff]
        %159 = vset.pattern.permute.xlu0 0
        %160 = vperm.xlu0 %159, %v158
        %v161 = vpop.permute.xlu0 %160
        %vm162 = vcmp.eq.s32.totalorder %v157, %v161
        %v163 = vsel %vm162, 1, 0
        %v164 = vcvt.s32.f32 %v163
        %v165 = vld [vmem:[#allocation2] sm:$0xff]
        %v166 = vld [vmem:[#allocation2 + $0x8] sm:$0xff]
        %v167 = vld [vmem:[#allocation2 + $0x10] sm:$0xff]
        %v168 = vld [vmem:[#allocation2 + $0x18] sm:$0xff]
        %v169 = vld [vmem:[#allocation2 + $0x20] sm:$0xff]
        %v170 = vld [vmem:[#allocation2 + $0x28] sm:$0xff]
        %v171 = vld [vmem:[#allocation2 + $0x30] sm:$0xff]
        %v172 = vld [vmem:[#allocation2 + $0x38] sm:$0xff]
        %v173 = vld [vmem:[#allocation2 + $0x40] sm:$0xff]
        %v174 = vld [vmem:[#allocation2 + $0x48] sm:$0xff]
        %v175 = vld [vmem:[#allocation2 + $0x50] sm:$0xff]
        %v176 = vld [vmem:[#allocation2 + $0x58] sm:$0xff]
        %v177 = vld [vmem:[#allocation2 + $0x60] sm:$0xff]
        %v178 = vld [vmem:[#allocation2 + $0x68] sm:$0xff]
        %v179 = vld [vmem:[#allocation2 + $0x70] sm:$0xff]
        %v180 = vld [vmem:[#allocation2 + $0x78] sm:$0xff]
        %181 = vmatpush.msra.mxu0 %v180
        %182 = vmatpush.msra.mxu0 %v179
        %183 = vmatpush.msra.mxu0 %v178
        %184 = vmatpush.msra.mxu0 %v177
        %185 = vmatpush.msra.mxu0 %v176
        %186 = vmatpush.msra.mxu0 %v175
        %187 = vmatpush.msra.mxu0 %v174
        %188 = vmatpush.msra.mxu0 %v173
        %189 = vmatpush.msra.mxu0 %v172
        %190 = vmatpush.msra.mxu0 %v171
        %191 = vmatpush.msra.mxu0 %v170
        %192 = vmatpush.msra.mxu0 %v169
        %193 = vmatpush.msra.mxu0 %v168
        %194 = vmatpush.msra.mxu0 %v167
        %195 = vmatpush.msra.mxu0 %v166
        %196 = vmatpush.msra.mxu0 %v165
        %197 = vmatmul.f32.gmra.mxu0 %v164
        %v198 = vpop.f32.mrf.mxu0
        %v199 = vadd.f32 0.0, %v198
        %200 = vdwg.mxu0
        %201 = vst [vmem:[%s151] sm:$0xff] %v199
        %s202 = sand.u32 %s72, 1
        %s203 = scalar_lea.sflag [#allocation4], %s202
        %s204 = sand.u32 %s72, 1
        %s205 = smul.addr %s204, 8
        %s206 = scalar_lea.vmem [#allocation5], %s205
        // Predicated region
        $region33: #{tpu_custom_call.1} parent=27 // pred_check
          %p207 = pneg %p82
        $region34: #{tpu_custom_call.1} parent=27 // pred_check_branch
          %209 = sbr.rel (%p207) target = $region36
        $region35: #{tpu_custom_call.1} parent=27 // pred_region
          %211 = vsyncadd %s203, 0
          %s212 = smul.addr %s17, 8
          %s213 = scalar_lea.hbm %s2, %s212
          %s215 = sshll.u32 %s206, 4
          %s216 = int_to_ptr.vmem [resolvable:$true] %s215
          %s217 = sshll.u32 %s213, 4
          %s218 = int_to_ptr.hbm [resolvable:$true] %s217
          %220 = dma.vmem_to_hbm [thread:$0]  %s216, 128, %s218, %s203
        $region36: #{tpu_custom_call.1} parent=27 // pred_fallthru
          _
      $region28: #{tpu_custom_call.1} parent=5 // pred_fallthru
        _
      %p221 = scmp.le.s32.totalorder 2, %s12
      // Predicated region
      $region37: #{tpu_custom_call.1} parent=5 // pred_check
        %p222 = pneg %p221
      $region38: #{tpu_custom_call.1} parent=5 // pred_check_branch
        %224 = sbr.rel (%p222) target = $region40
      $region39: #{tpu_custom_call.1} parent=5 // pred_region
        %s225 = ssub.s32 %s12, 2
        // Predicated region
        $region41: #{tpu_custom_call.1} parent=39 // pred_check
          %p226 = pneg %p88
        $region42: #{tpu_custom_call.1} parent=39 // pred_check_branch
          %228 = sbr.rel (%p226) target = $region44
        $region43: #{tpu_custom_call.1} parent=39 // pred_region
          %s229 = sand.u32 %s73, 1
          %s230 = scalar_lea.sflag [#allocation4], %s229
          %s231 = sand.u32 %s73, 1
          %s232 = smul.addr %s231, 8
          %s233 = scalar_lea.vmem [#allocation5], %s232
          %235 = dma.done %s230, 128
        $region44: #{tpu_custom_call.1} parent=39 // pred_fallthru
          _
      $region40: #{tpu_custom_call.1} parent=5 // pred_fallthru
        _
    $region6: #{tpu_custom_call.1} parent=1 // loop_footer
      %s16 = sadd.s32 1, %s12
    $region7: #{tpu_custom_call.1} parent=1 // loop_footer_branch
      %11 = sbr.rel target = $region3
    $region8: #{tpu_custom_call.1} parent=1 // loop_exit
      _
    %236 = vsyncpa [#allocation3], 1
    %s237 = scalar_lea.sflag [#allocation3], 1
    %238 = vsyncpa %s237, 1
    %239 = vsyncpa [#allocation4], 1
    %s240 = scalar_lea.sflag [#allocation4], 1
    %241 = vsyncpa %s240, 1

</llo_original>
